<compile_context>
chip_gen: v7x
topology: tpu7x:2x2x1
jax: 0.10.0
libtpu: 0.0.40
codegen_flags: <defaults>
</compile_context>

<pallas_src>
import jax
import jax.numpy as jnp
from jax import lax
from jax.experimental import pallas as pl
from jax.experimental.pallas import tpu as pltpu

LEAKY_SLOPE = 0.01  # nn.LeakyReLU default negative_slope


def _make_conv_kernel(KH, KW, Cin, Wp, M_flat, stride):
    """Builds the per-tile kernel body; all shape params are static."""
    bases = [kh * Wp + kw for kh in range(KH) for kw in range(KW)]

    def kernel(x_ref, w_ref, b_ref, o_ref, p_ref):
        # x_ref : (1, 1, Cin, L)       halo'd, row-flattened input tile
        # w_ref : (Cout, K)            K = KH*KW*Cin, row order (kh, kw, c)
        # b_ref : (Cout, 1)            bias
        # o_ref : (1, 1, Cout, M_flat) output tile, M_flat = TILE_H*Wp lanes
        # p_ref : (K, M_flat)          VMEM scratch: patch matrix
        x = x_ref[0, 0]                                     # (Cin, L)

        # Build the KH*KW taps in VMEM (no HBM im2col, no in-kernel reshapes).
        for idx, base in enumerate(bases):
            if stride == 1:
                tap = x[:, base:base + M_flat]
            else:
                # TODO(synk): stride>1 uses an in-kernel strided lane slice;
                # if Mosaic rejects it, fall back to wrapper-side im2col.
                tap = x[:, base:base + stride * (M_flat - 1) + 1:stride]
            p_ref[idx * Cin:(idx + 1) * Cin, :] = tap

        # Single MXU pass per tile: (Cout, K) @ (K, M_flat) -> f32 accumulator.
        acc = jnp.dot(w_ref[...], p_ref[...],
                      preferred_element_type=jnp.float32)
        acc = acc + b_ref[...].astype(jnp.float32)          # broadcast bias
        out = jnp.maximum(acc, LEAKY_SLOPE * acc)           # LeakyReLU (VPU)
        o_ref[0, 0] = out.astype(o_ref.dtype)

    return kernel


def basic_conv_pallas(x_nchw, weight_oihw, bias, *, kernel_size, stride=1,
                      target_tile_lanes=1024, compute_dtype=None):
    """Pallas implementation of BasicConv forward (conv + bias + LeakyReLU).

    x_nchw:      (N, Cin, H, W) float32
    weight_oihw: (Cout, Cin, KH, KW)
    bias:        (Cout,)
    compute_dtype: optionally bf16 on v6e/v7x (halves patch DMA/VMEM); the
                   accumulator and bias/LeakyReLU stay f32.
    returns      (N, Cout, H_out, W_out)
    """
    N, Cin, H, W = x_nchw.shape
    Cout = weight_oihw.shape[0]
    KH = KW = kernel_size
    pad = kernel_size // 2
    s = stride

    Hp, Wp = H + 2 * pad, W + 2 * pad
    H_out = (Hp - KH) // s + 1
    W_out = (Wp - KW) // s + 1
    K = KH * KW * Cin

    # Row-tile height from a lane budget: bounds per-step VMEM, gives the
    # pipeline enough steps for DMA/compute overlap, feeds both v7x cores.
    TILE_H = max(1, min(H_out, target_tile_lanes // Wp))
    T = pl.cdiv(H_out, TILE_H)
    M_flat = TILE_H * Wp                                   # output lanes/tile
    # Flat input elements any tap slice of a tile may touch.
    L = (KH - 1) * Wp + (KW - 1) + s * (M_flat - 1) + 1

    # ---- wrapper-side glue (plain XLA): pad, flatten rows, halo'd tiles ----
    x_pad = jnp.pad(x_nchw, ((0, 0), (0, 0), (pad, pad), (pad, pad)))
    x_flat = x_pad.reshape(N, Cin, Hp * Wp)
    need = (T - 1) * TILE_H * s * Wp + L
    if need > Hp * Wp:
        x_flat = jnp.pad(x_flat, ((0, 0), (0, 0), (0, need - Hp * Wp)))
    x_tiles = jnp.stack(
        [lax.slice_in_dim(x_flat, t * TILE_H * s * Wp,
                          t * TILE_H * s * Wp + L, axis=2)
         for t in range(T)],
        axis=1)                                            # (N, T, Cin, L)

    # (Cout,Cin,KH,KW) -> (Cout,KH,KW,Cin) -> (Cout,K); K order matches the
    # tap-major assembly in the kernel.
    w2d = jnp.transpose(weight_oihw, (0, 2, 3, 1)).reshape(Cout, K)
    b2d = bias.reshape(Cout, 1).astype(jnp.float32)

    if compute_dtype is not None:
        x_tiles = x_tiles.astype(compute_dtype)
        w2d = w2d.astype(compute_dtype)

    kernel = _make_conv_kernel(KH, KW, Cin, Wp, M_flat, s)

    out = pl.pallas_call(
        kernel,
        out_shape=jax.ShapeDtypeStruct((N, T, Cout, M_flat), x_nchw.dtype),
        grid=(N, T),
        in_specs=[
            pl.BlockSpec((1, 1, Cin, L), lambda n, t: (n, t, 0, 0)),
            pl.BlockSpec((Cout, K), lambda n, t: (0, 0)),   # resident weights
            pl.BlockSpec((Cout, 1), lambda n, t: (0, 0)),   # resident bias
        ],
        out_specs=pl.BlockSpec((1, 1, Cout, M_flat), lambda n, t: (n, t, 0, 0)),
        scratch_shapes=[pltpu.VMEM((K, M_flat), x_tiles.dtype)],
        compiler_params=pltpu.CompilerParams(
            dimension_semantics=("parallel", "parallel")),
    )(x_tiles, w2d, b2d)

    # Drop per-row garbage columns / ragged-tile garbage rows, assemble NCHW.
    out = out.reshape(N, T, Cout, TILE_H, Wp)
    if T == 1:
        y = out.reshape(N, Cout, TILE_H, Wp)
    else:
        y = jnp.transpose(out, (0, 2, 1, 3, 4)).reshape(N, Cout, T * TILE_H, Wp)
    return y[:, :, :H_out, :W_out]


def _reference(x_nchw, weight_oihw, bias, *, kernel_size, stride=1):
    """Pure-JAX reference matching PyTorch Conv2d + LeakyReLU."""
    pad = kernel_size // 2
    y = lax.conv_general_dilated(
        x_nchw, weight_oihw,
        window_strides=(stride, stride),
        padding=((pad, pad), (pad, pad)),
        dimension_numbers=("NCHW", "OIHW", "NCHW"))
    y = y + bias.reshape(1, -1, 1, 1)
    return jnp.where(y > 0, y, LEAKY_SLOPE * y)


if __name__ == "__main__":
    # Module config: BasicConv(in_channel=4, out_channel=8, kernel_size=3, stride=1)
    N, Cin, H, W = 2, 4, 16, 16
    Cout, Ksz = 8, 3

    key = jax.random.PRNGKey(0)
    kx, kw, kb = jax.random.split(key, 3)
    x = jax.random.normal(kx, (N, Cin, H, W), dtype=jnp.float32)
    weight = jax.random.normal(kw, (Cout, Cin, Ksz, Ksz), dtype=jnp.float32) * 0.1
    bias = jax.random.normal(kb, (Cout,), dtype=jnp.float32) * 0.1

    ref = _reference(x, weight, bias, kernel_size=Ksz, stride=1)

    # Multi-row-tile path: TILE_H = 8 -> 2 tiles per image, grid = (2, 2).
    out = basic_conv_pallas(x, weight, bias, kernel_size=Ksz, stride=1,
                            target_tile_lanes=8 * (W + 2))
    out = jax.block_until_ready(out)
    assert out.shape == (N, Cout, H, W)
    assert jnp.allclose(out, ref, atol=1e-4, rtol=1e-5), "mismatch (tiled)"

    # Single-tile-per-image path (default lane budget).
    out2 = basic_conv_pallas(x, weight, bias, kernel_size=Ksz, stride=1)
    out2 = jax.block_until_ready(out2)
    assert jnp.allclose(out2, ref, atol=1e-4, rtol=1e-5), "mismatch (full tile)"

    print("KERNEL_OK")
</pallas_src>

<mosaic_0001>
module attributes {stable_mosaic.version = 11 : i64} {
  func.func @kernel(%arg0: i32, %arg1: i32, %arg2: memref<1x1x4x182xf32, #tpu.memory_space<vmem>>, %arg3: memref<8x36xf32, #tpu.memory_space<vmem>>, %arg4: memref<8x1xf32, #tpu.memory_space<vmem>>, %arg5: memref<1x1x8x144xf32, #tpu.memory_space<vmem>>, %arg6: memref<36x144xf32, #tpu.memory_space<vmem>>) attributes {dimension_semantics = [#tpu.dimension_semantics<parallel>, #tpu.dimension_semantics<parallel>], iteration_bounds = array<i64: 2, 2>, scalar_prefetch = 0 : i64, scratch_operands = 1 : i64, tpu.core_type = #tpu.core_type<tc>, window_params = [{transform_indices = @transform_0, window_bounds = array<i64: 1, 1, 4, 182>}, {pipeline_mode = #tpu.pipeline_mode<synchronous>, transform_indices = @transform_1, window_bounds = array<i64: 8, 36>}, {pipeline_mode = #tpu.pipeline_mode<synchronous>, transform_indices = @transform_2, window_bounds = array<i64: 8, 1>}, {transform_indices = @transform_3, window_bounds = array<i64: 1, 1, 8, 144>}]} {
    %c0 = arith.constant 0 : index
    %c0_0 = arith.constant 0 : index
    %c0_1 = arith.constant 0 : index
    %c0_2 = arith.constant 0 : index
    %0 = vector.load %arg2[%c0, %c0_0, %c0_1, %c0_2] : memref<1x1x4x182xf32, #tpu.memory_space<vmem>>, vector<1x1x4x182xf32>
    %1 = vector.shape_cast %0 : vector<1x1x4x182xf32> to vector<4x182xf32>
    %2 = vector.extract_strided_slice %1 {offsets = [0, 0], sizes = [4, 144], strides = [1, 1]} : vector<4x182xf32> to vector<4x144xf32>
    %c0_3 = arith.constant 0 : index
    %c0_4 = arith.constant 0 : index
    %3 = vector.load %arg6[%c0_3, %c0_4] : memref<36x144xf32, #tpu.memory_space<vmem>>, vector<4x144xf32>
    tpu.vector_store %arg6[%c0_3, %c0_4], %2 {strides = array<i32>} : memref<36x144xf32, #tpu.memory_space<vmem>>, vector<4x144xf32>,
    %4 = vector.extract_strided_slice %1 {offsets = [0, 1], sizes = [4, 144], strides = [1, 1]} : vector<4x182xf32> to vector<4x144xf32>
    %c4 = arith.constant 4 : index
    %c0_5 = arith.constant 0 : index
    %5 = vector.load %arg6[%c4, %c0_5] : memref<36x144xf32, #tpu.memory_space<vmem>>, vector<4x144xf32>
    tpu.vector_store %arg6[%c4, %c0_5], %4 {strides = array<i32>} : memref<36x144xf32, #tpu.memory_space<vmem>>, vector<4x144xf32>,
    %6 = vector.extract_strided_slice %1 {offsets = [0, 2], sizes = [4, 144], strides = [1, 1]} : vector<4x182xf32> to vector<4x144xf32>
    %c8 = arith.constant 8 : index
    %c0_6 = arith.constant 0 : index
    %7 = vector.load %arg6[%c8, %c0_6] : memref<36x144xf32, #tpu.memory_space<vmem>>, vector<4x144xf32>
    tpu.vector_store %arg6[%c8, %c0_6], %6 {strides = array<i32>} : memref<36x144xf32, #tpu.memory_space<vmem>>, vector<4x144xf32>,
    %8 = vector.extract_strided_slice %1 {offsets = [0, 18], sizes = [4, 144], strides = [1, 1]} : vector<4x182xf32> to vector<4x144xf32>
    %c12 = arith.constant 12 : index
    %c0_7 = arith.constant 0 : index
    %9 = vector.load %arg6[%c12, %c0_7] : memref<36x144xf32, #tpu.memory_space<vmem>>, vector<4x144xf32>
    tpu.vector_store %arg6[%c12, %c0_7], %8 {strides = array<i32>} : memref<36x144xf32, #tpu.memory_space<vmem>>, vector<4x144xf32>,
    %10 = vector.extract_strided_slice %1 {offsets = [0, 19], sizes = [4, 144], strides = [1, 1]} : vector<4x182xf32> to vector<4x144xf32>
    %c16 = arith.constant 16 : index
    %c0_8 = arith.constant 0 : index
    %11 = vector.load %arg6[%c16, %c0_8] : memref<36x144xf32, #tpu.memory_space<vmem>>, vector<4x144xf32>
    tpu.vector_store %arg6[%c16, %c0_8], %10 {strides = array<i32>} : memref<36x144xf32, #tpu.memory_space<vmem>>, vector<4x144xf32>,
    %12 = vector.extract_strided_slice %1 {offsets = [0, 20], sizes = [4, 144], strides = [1, 1]} : vector<4x182xf32> to vector<4x144xf32>
    %c20 = arith.constant 20 : index
    %c0_9 = arith.constant 0 : index
    %13 = vector.load %arg6[%c20, %c0_9] : memref<36x144xf32, #tpu.memory_space<vmem>>, vector<4x144xf32>
    tpu.vector_store %arg6[%c20, %c0_9], %12 {strides = array<i32>} : memref<36x144xf32, #tpu.memory_space<vmem>>, vector<4x144xf32>,
    %14 = vector.extract_strided_slice %1 {offsets = [0, 36], sizes = [4, 144], strides = [1, 1]} : vector<4x182xf32> to vector<4x144xf32>
    %c24 = arith.constant 24 : index
    %c0_10 = arith.constant 0 : index
    %15 = vector.load %arg6[%c24, %c0_10] : memref<36x144xf32, #tpu.memory_space<vmem>>, vector<4x144xf32>
    tpu.vector_store %arg6[%c24, %c0_10], %14 {strides = array<i32>} : memref<36x144xf32, #tpu.memory_space<vmem>>, vector<4x144xf32>,
    %16 = vector.extract_strided_slice %1 {offsets = [0, 37], sizes = [4, 144], strides = [1, 1]} : vector<4x182xf32> to vector<4x144xf32>
    %c28 = arith.constant 28 : index
    %c0_11 = arith.constant 0 : index
    %17 = vector.load %arg6[%c28, %c0_11] : memref<36x144xf32, #tpu.memory_space<vmem>>, vector<4x144xf32>
    tpu.vector_store %arg6[%c28, %c0_11], %16 {strides = array<i32>} : memref<36x144xf32, #tpu.memory_space<vmem>>, vector<4x144xf32>,
    %18 = vector.extract_strided_slice %1 {offsets = [0, 38], sizes = [4, 144], strides = [1, 1]} : vector<4x182xf32> to vector<4x144xf32>
    %c32 = arith.constant 32 : index
    %c0_12 = arith.constant 0 : index
    %19 = vector.load %arg6[%c32, %c0_12] : memref<36x144xf32, #tpu.memory_space<vmem>>, vector<4x144xf32>
    tpu.vector_store %arg6[%c32, %c0_12], %18 {strides = array<i32>} : memref<36x144xf32, #tpu.memory_space<vmem>>, vector<4x144xf32>,
    %c0_13 = arith.constant 0 : index
    %c0_14 = arith.constant 0 : index
    %20 = vector.load %arg3[%c0_13, %c0_14] : memref<8x36xf32, #tpu.memory_space<vmem>>, vector<8x36xf32>
    %c0_15 = arith.constant 0 : index
    %c0_16 = arith.constant 0 : index
    %21 = vector.load %arg6[%c0_15, %c0_16] : memref<36x144xf32, #tpu.memory_space<vmem>>, vector<36x144xf32>
    %cst = arith.constant dense<0.000000e+00> : vector<8x144xf32>
    %22 = tpu.matmul %20, %21, %cst {dimension_numbers = #tpu.dot_dimension_numbers<[1], [0], [0], [1], [0, 0, 1, 1], [], []>} : vector<8x36xf32>, vector<36x144xf32>, vector<8x144xf32> -> vector<8x144xf32>
    %c0_17 = arith.constant 0 : index
    %c0_18 = arith.constant 0 : index
    %23 = vector.load %arg4[%c0_17, %c0_18] : memref<8x1xf32, #tpu.memory_space<vmem>>, vector<8x1xf32>
    %24 = vector.broadcast %23 : vector<8x1xf32> to vector<8x144xf32>
    %25 = arith.addf %22, %24 : vector<8x144xf32>
    %cst_19 = arith.constant 0.00999999977 : f32
    %26 = vector.broadcast %cst_19 : f32 to vector<8x144xf32>
    %27 = arith.mulf %26, %25 : vector<8x144xf32>
    %28 = arith.maximumf %25, %27 : vector<8x144xf32>
    %c0_20 = arith.constant 0 : index
    %c0_21 = arith.constant 0 : index
    %c0_22 = arith.constant 0 : index
    %c0_23 = arith.constant 0 : index
    %29 = vector.load %arg5[%c0_20, %c0_21, %c0_22, %c0_23] : memref<1x1x8x144xf32, #tpu.memory_space<vmem>>, vector<1x1x8x144xf32>
    %30 = vector.shape_cast %29 : vector<1x1x8x144xf32> to vector<8x144xf32>
    %31 = vector.shape_cast %28 : vector<8x144xf32> to vector<1x1x8x144xf32>
    tpu.vector_store %arg5[%c0_20, %c0_21, %c0_22, %c0_23], %31 {strides = array<i32>} : memref<1x1x8x144xf32, #tpu.memory_space<vmem>>, vector<1x1x8x144xf32>,
    return
  }
  func.func @transform_0(%arg0: i32, %arg1: i32) -> (i32, i32, i32, i32) {
    %c0_i32 = arith.constant 0 : i32
    %c0_i32_0 = arith.constant 0 : i32
    %c0_i32_1 = arith.constant 0 : i32
    return %arg0, %arg1, %c0_i32, %c0_i32_0 : i32, i32, i32, i32
  }
  func.func @transform_1(%arg0: i32, %arg1: i32) -> (i32, i32) {
    %c0_i32 = arith.constant 0 : i32
    %c0_i32_0 = arith.constant 0 : i32
    %c0_i32_1 = arith.constant 0 : i32
    return %c0_i32, %c0_i32_0 : i32, i32
  }
  func.func @transform_2(%arg0: i32, %arg1: i32) -> (i32, i32) {
    %c0_i32 = arith.constant 0 : i32
    %c0_i32_0 = arith.constant 0 : i32
    %c0_i32_1 = arith.constant 0 : i32
    return %c0_i32, %c0_i32_0 : i32, i32
  }
  func.func @transform_3(%arg0: i32, %arg1: i32) -> (i32, i32, i32, i32) {
    %c0_i32 = arith.constant 0 : i32
    %c0_i32_0 = arith.constant 0 : i32
    %c0_i32_1 = arith.constant 0 : i32
    return %arg0, %arg1, %c0_i32, %c0_i32_0 : i32, i32, i32, i32
  }
}

</mosaic_0001>

<llo_original>
// kernel: tpu_custom_call.1
$region0: #{tpu_custom_call.1}
  #allocation0 [shape = 'u32[]', space=smem, size = 0x4, offset = 0x4, fixed_abs, tag = 'smem constant byte address 0x4 - core index']
  #allocation1 [shape = 'u32[144,128]{1,0:T(1,128)}', space=vmem, size = 0x12000, scoped, tag = 'internal scratch']
  #allocation2 [shape = 'f32[36,144]{1,0:T(8,128)}', space=vmem, size = 0xa000, scoped, tag = 'scratch operand']
  %s0 = inlined_call_operand.hbm [shape: f32[2,2,4,182], index: 0, kind: input, shape index: {}]
  %s1 = inlined_call_operand.vmem [shape: f32[8,36], index: 1, kind: input, shape index: {}]
  %s2 = inlined_call_operand.vmem [shape: f32[8,1], index: 2, kind: input, shape index: {}]
  %s3 = inlined_call_operand.hbm [shape: f32[2,2,8,144], index: 3, kind: output, shape index: {}]
  %s4 = sld [smem:[#allocation0]]
  $region49: #{tpu_custom_call.1} parent=0
    _
  %s6 = ssub.s32 1, %s4
  %s7 = scalar_select 0, %s6, %s4
  $region1: #{tpu_custom_call.1} parent=0
    #allocation3 [shape = 'u8[8192]{0}', space=vmem, size = 0x2000, scoped, tag = 'input window, operand 0']
    #allocation4 [shape = 's32[2]{0}', space=sflag, size = 0x8, scoped, tag = 'scoped memory for tpu_custom_call.1']
    #allocation5 [shape = 's32[2]{0}', space=sflag, size = 0x8, scoped, tag = 'scoped memory for tpu_custom_call.1']
    #allocation6 [shape = 'u8[16384]{0}', space=vmem, size = 0x4000, scoped, tag = 'output window, operand 0']
    %8 = vsyncpa [#allocation4], 0
    %s9 = scalar_lea.sflag [#allocation4], 1
    %10 = vsyncpa %s9, 0
    %11 = vsyncpa [#allocation5], 0
    %s12 = scalar_lea.sflag [#allocation5], 1
    %13 = vsyncpa %s12, 0
    loop: start=0, step=1, limit=6
    $region2: #{tpu_custom_call.1} parent=1 // loop_pre_header
      _
    $region3: #{tpu_custom_call.1} parent=1 // loop_header
      %s15 = sphi 0, %s19
      %p16 = scmp.ge.s32.totalorder %s15, 6
      %s22 = sphi 0, %s34
      %s23 = sphi 0, %s30
      %s24 = sphi 0, %s22
      %s25 = sphi 0, %s23
      %s26 = sphi 0, %s24
      %s27 = sphi 0, %s25
      %s39 = sphi 0, %s41
      %s42 = sphi 0, %s39
      %s43 = sphi 0, %s42
      %s59 = sphi 0, %s43
      %s63 = sphi 0, %s63
      %s65 = sphi 0, %s63
      %s66 = sphi 0, %s65
      %s80 = sphi 0, %s66
      %s84 = sphi 0, %s84
      %s86 = sphi 0, %s84
      %s87 = sphi 0, %s86
      %s101 = sphi 0, %s87
      %s109 = sphi 0, %s111
      %s112 = sphi 0, %s109
      %s113 = sphi 0, %s112
      %s129 = sphi 0, %s113
    $region4: #{tpu_custom_call.1} parent=1 // loop_header_branch
      %18 = sbr.rel (%p16) target = $region8
    $region5: #{tpu_custom_call.1} parent=1 // loop_body
      %s20 = ssub.s32 %s15, 1
      %s21 = ssub.s32 %s15, 2
      %s28 = sadd.s32 1, %s23
      %p29 = scmp.ge.s32.totalorder %s28, 2
      %s30 = scalar_select %p29, 0, %s28
      %s31 = sadd.s32 1, %s22
      %s32 = scalar_select %p29, %s31, %s22
      %p33 = scmp.ge.s32.totalorder %s32, 2
      %s34 = scalar_select %p33, 0, %s32
      %s35 = ssub.s32 %s22, %s34
      %s36 = ssub.s32 %s23, %s30
      %s37 = sor.u32 %s35, %s36
      %p38 = scmp.eq.s32.totalorder %s37, 0
      %s40 = sadd.s32 %s39, 1
      %s41 = scalar_select %p38, %s39, %s40
      %p44 = pneg %p38
      %p45 = scmp.eq.s32.totalorder %s15, 3
      %p46 = por %p44, %p45
      %p47 = scmp.ne.s32.totalorder %s39, %s42
      %p48 = scmp.eq.s32.totalorder %s15, 0
      %p49 = por %p47, %p48
      %p50 = scmp.ne.s32.totalorder %s39, %s42
      %p51 = scmp.eq.s32.totalorder %s20, 3
      %p52 = por %p50, %p51
      %p53 = scmp.ne.s32.totalorder %s42, %s43
      %p54 = scmp.eq.s32.totalorder %s20, 0
      %p55 = por %p53, %p54
      %p56 = scmp.ne.s32.totalorder %s42, %s43
      %p57 = scmp.eq.s32.totalorder %s21, 3
      %p58 = por %p56, %p57
      %p60 = scmp.ne.s32.totalorder %s43, %s59
      %p61 = scmp.eq.s32.totalorder %s21, 0
      %p62 = por %p60, %p61
      %s64 = sadd.s32 %s63, 1
      %p67 = scmp.eq.s32.totalorder %s15, 3
      %p68 = scmp.ne.s32.totalorder %s63, %s65
      %p69 = scmp.eq.s32.totalorder %s15, 0
      %p70 = por %p68, %p69
      %p71 = scmp.ne.s32.totalorder %s63, %s65
      %p72 = scmp.eq.s32.totalorder %s20, 3
      %p73 = por %p71, %p72
      %p74 = scmp.ne.s32.totalorder %s65, %s66
      %p75 = scmp.eq.s32.totalorder %s20, 0
      %p76 = por %p74, %p75
      %p77 = scmp.ne.s32.totalorder %s65, %s66
      %p78 = scmp.eq.s32.totalorder %s21, 3
      %p79 = por %p77, %p78
      %p81 = scmp.ne.s32.totalorder %s66, %s80
      %p82 = scmp.eq.s32.totalorder %s21, 0
      %p83 = por %p81, %p82
      %s85 = sadd.s32 %s84, 1
      %p88 = scmp.eq.s32.totalorder %s15, 3
      %p89 = scmp.ne.s32.totalorder %s84, %s86
      %p90 = scmp.eq.s32.totalorder %s15, 0
      %p91 = por %p89, %p90
      %p92 = scmp.ne.s32.totalorder %s84, %s86
      %p93 = scmp.eq.s32.totalorder %s20, 3
      %p94 = por %p92, %p93
      %p95 = scmp.ne.s32.totalorder %s86, %s87
      %p96 = scmp.eq.s32.totalorder %s20, 0
      %p97 = por %p95, %p96
      %p98 = scmp.ne.s32.totalorder %s86, %s87
      %p99 = scmp.eq.s32.totalorder %s21, 3
      %p100 = por %p98, %p99
      %p102 = scmp.ne.s32.totalorder %s87, %s101
      %p103 = scmp.eq.s32.totalorder %s21, 0
      %p104 = por %p102, %p103
      %s105 = ssub.s32 %s22, %s34
      %s106 = ssub.s32 %s23, %s30
      %s107 = sor.u32 %s105, %s106
      %p108 = scmp.eq.s32.totalorder %s107, 0
      %s110 = sadd.s32 %s109, 1
      %s111 = scalar_select %p108, %s109, %s110
      %p114 = pneg %p108
      %p115 = scmp.eq.s32.totalorder %s15, 3
      %p116 = por %p114, %p115
      %p117 = scmp.ne.s32.totalorder %s109, %s112
      %p118 = scmp.eq.s32.totalorder %s15, 0
      %p119 = por %p117, %p118
      %p120 = scmp.ne.s32.totalorder %s109, %s112
      %p121 = scmp.eq.s32.totalorder %s20, 3
      %p122 = por %p120, %p121
      %p123 = scmp.ne.s32.totalorder %s112, %s113
      %p124 = scmp.eq.s32.totalorder %s20, 0
      %p125 = por %p123, %p124
      %p126 = scmp.ne.s32.totalorder %s112, %s113
      %p127 = scmp.eq.s32.totalorder %s21, 3
      %p128 = por %p126, %p127
      %p130 = scmp.ne.s32.totalorder %s113, %s129
      %p131 = scmp.eq.s32.totalorder %s21, 0
      %p132 = por %p130, %p131
      %p133 = scmp.le.s32.totalorder 1, %s15
      %p134 = scmp.lt.s32.totalorder %s15, 5
      %p135 = pnand %p133, %p134
      %p136 = pneg %p135
      // Predicated region
      $region9: #{tpu_custom_call.1} parent=5 // pred_check
        _
      $region10: #{tpu_custom_call.1} parent=5 // pred_check_branch
        %138 = sbr.rel (%p135) target = $region12
      $region11: #{tpu_custom_call.1} parent=5 // pred_region
        %s139 = ssub.s32 %s15, 1
        // Predicated region
        $region13: #{tpu_custom_call.1} parent=11 // pred_check
          %p140 = pneg %p76
        $region14: #{tpu_custom_call.1} parent=11 // pred_check_branch
          %142 = sbr.rel (%p140) target = $region16
        $region15: #{tpu_custom_call.1} parent=11 // pred_region
          _
        $region16: #{tpu_custom_call.1} parent=11 // pred_fallthru
          _
        // Predicated region
        $region17: #{tpu_custom_call.1} parent=11 // pred_check
          %p143 = pneg %p97
        $region18: #{tpu_custom_call.1} parent=11 // pred_check_branch
          %145 = sbr.rel (%p143) target = $region20
        $region19: #{tpu_custom_call.1} parent=11 // pred_region
          _
        $region20: #{tpu_custom_call.1} parent=11 // pred_fallthru
          _
      $region12: #{tpu_custom_call.1} parent=5 // pred_fallthru
        _
      %p146 = scmp.lt.s32.totalorder %s15, 4
      // Predicated region
      $region21: #{tpu_custom_call.1} parent=5 // pred_check
        %p147 = pneg %p146
      $region22: #{tpu_custom_call.1} parent=5 // pred_check_branch
        %149 = sbr.rel (%p147) target = $region24
      $region23: #{tpu_custom_call.1} parent=5 // pred_region
        // Predicated region
        $region25: #{tpu_custom_call.1} parent=23 // pred_check
          %p150 = pneg %p49
        $region26: #{tpu_custom_call.1} parent=23 // pred_check_branch
          %152 = sbr.rel (%p150) target = $region28
        $region27: #{tpu_custom_call.1} parent=23 // pred_region
          %s153 = sand.u32 %s39, 1
          %s154 = scalar_lea.sflag [#allocation4], %s153
          %s155 = sand.u32 %s39, 1
          %s156 = smul.addr %s155, 8
          %s157 = scalar_lea.vmem [#allocation3], %s156
          %s159 = ssub.s32 128, 128
          %160 = vsyncadd %s154, %s159
          %s161 = smul.addr %s23, 2
          %s162 = smul.addr %s22, 4
          %s163 = sadd.s32 %s161, %s162
          %s164 = smul.addr %s163, 64
          %s165 = scalar_lea.hbm %s0, %s164
          %s167 = sshll.u32 %s157, 4
          %s168 = int_to_ptr.vmem [resolvable:$true] %s167
          %170 = dma.hbm_to_vmem [thread:$0]  %s165, 128, %s168, %s154
        $region28: #{tpu_custom_call.1} parent=23 // pred_fallthru
          _
      $region24: #{tpu_custom_call.1} parent=5 // pred_fallthru
        _
      %p171 = scmp.le.s32.totalorder 1, %s15
      %p172 = scmp.lt.s32.totalorder %s15, 5
      %p173 = pnand %p171, %p172
      %p174 = pneg %p173
      // Predicated region
      $region29: #{tpu_custom_call.1} parent=5 // pred_check
        _
      $region30: #{tpu_custom_call.1} parent=5 // pred_check_branch
        %176 = sbr.rel (%p173) target = $region32
      $region31: #{tpu_custom_call.1} parent=5 // pred_region
        %s177 = ssub.s32 %s15, 1
        %s178 = sand.u32 %s42, 1
        %s179 = scalar_lea.sflag [#allocation4], %s178
        %s180 = sand.u32 %s42, 1
        %s181 = smul.addr %s180, 8
        %s182 = scalar_lea.vmem [#allocation3], %s181
        // Predicated region
        $region33: #{tpu_custom_call.1} parent=31 // pred_check
          %p183 = pneg %p55
        $region34: #{tpu_custom_call.1} parent=31 // pred_check_branch
          %185 = sbr.rel (%p183) target = $region36
        $region35: #{tpu_custom_call.1} parent=31 // pred_region
          %186 = dma.done %s179, 128
        $region36: #{tpu_custom_call.1} parent=31 // pred_fallthru
          _
        %s187 = sand.u32 %s42, 1
        %s188 = scalar_lea.sflag [#allocation4], %s187
        %s189 = sand.u32 %s42, 1
        %s190 = smul.addr %s189, 8
        %s191 = scalar_lea.vmem [#allocation3], %s190
        %p192 = pneg %p55
        %p193 = pneg %p52
        %p194 = pneg %p76
        %p195 = pneg %p73
        %p196 = pneg %p97
        %p197 = pneg %p94
        %p198 = pneg %p125
        %p199 = pneg %p122
        %s200 = sand.u32 %s112, 1
        %s201 = scalar_lea.sflag [#allocation5], %s200
        %s202 = sand.u32 %s112, 1
        %s203 = smul.addr %s202, 16
        %s204 = scalar_lea.vmem [#allocation6], %s203
        %v205 = vld [vmem:[%s182] sm:$0xff]
        %v207 = vcombine.high %v205, %v205
        %209 = vst [vmem:[#allocation2] sm:$0xf] %v205
        %vm210 = vcmask 125952
        %211 = vst.msk [vmem:[#allocation2 + $0x8] sm:$0xf] %vm210, %v207
        %v212 = vcombine.low %v205, %v205
        %213 = vrot.lane.b32.xlu0 %v212, 127
        %v214 = vpop.permute.xlu0 %213
        %215 = vrot.lane.b32.xlu0 %v205, 127
        %v216 = vpop.permute.xlu0 %215
        %vm217 = vcmask 1039360
        %v218 = vsel %vm217, %v214, %v216
        %221 = vst [vmem:[#allocation2] sm:$0xf0] %v218
        %vm222 = vcmask 130052
        %223 = vst.msk [vmem:[#allocation2 + $0x8] sm:$0xf0] %vm222, %v216
        %224 = vrot.lane.b32.xlu0 %v205, 126
        %v225 = vpop.permute.xlu0 %224
        %226 = vrot.lane.b32.xlu0 %v207, 126
        %v227 = vpop.permute.xlu0 %226
        %vm228 = vcmask 1031168
        %v229 = vsel %vm228, %v225, %v227
        %232 = vst [vmem:[#allocation2 + $0x10] sm:$0xf] %v229
        %233 = vst.msk [vmem:[#allocation2 + $0x18] sm:$0xf] %vm210, %v227
        %234 = vrot.lane.b32.xlu0 %v212, 110
        %v235 = vpop.permute.xlu0 %234
        %236 = vrot.lane.b32.xlu0 %v205, 110
        %v237 = vpop.permute.xlu0 %236
        %vm238 = vcmask 900096
        %v239 = vsel %vm238, %v235, %v237
        %242 = vst [vmem:[#allocation2 + $0x10] sm:$0xf0] %v239
        %243 = vst.msk [vmem:[#allocation2 + $0x18] sm:$0xf0] %vm222, %v237
        %244 = vrot.lane.b32.xlu0 %v205, 109
        %v245 = vpop.permute.xlu0 %244
        %246 = vrot.lane.b32.xlu0 %v207, 109
        %v247 = vpop.permute.xlu0 %246
        %vm248 = vcmask 891904
        %v249 = vsel %vm248, %v245, %v247
        %252 = vst [vmem:[#allocation2 + $0x20] sm:$0xf] %v249
        %253 = vst.msk [vmem:[#allocation2 + $0x28] sm:$0xf] %vm210, %v247
        %254 = vrot.lane.b32.xlu0 %v212, 108
        %v255 = vpop.permute.xlu0 %254
        %256 = vrot.lane.b32.xlu0 %v205, 108
        %v257 = vpop.permute.xlu0 %256
        %vm258 = vcmask 883712
        %v259 = vsel %vm258, %v255, %v257
        %262 = vst [vmem:[#allocation2 + $0x20] sm:$0xf0] %v259
        %263 = vst.msk [vmem:[#allocation2 + $0x28] sm:$0xf0] %vm222, %v257
        %264 = vrot.lane.b32.xlu0 %v205, 92
        %v265 = vpop.permute.xlu0 %264
        %266 = vrot.lane.b32.xlu0 %v207, 92
        %v267 = vpop.permute.xlu0 %266
        %vm268 = vcmask 752640
        %v269 = vsel %vm268, %v265, %v267
        %272 = vst [vmem:[#allocation2 + $0x30] sm:$0xf] %v269
        %273 = vst.msk [vmem:[#allocation2 + $0x38] sm:$0xf] %vm210, %v267
        %274 = vrot.lane.b32.xlu0 %v212, 91
        %v275 = vpop.permute.xlu0 %274
        %276 = vrot.lane.b32.xlu0 %v205, 91
        %v277 = vpop.permute.xlu0 %276
        %vm278 = vcmask 744448
        %v279 = vsel %vm278, %v275, %v277
        %282 = vst [vmem:[#allocation2 + $0x30] sm:$0xf0] %v279
        %283 = vst.msk [vmem:[#allocation2 + $0x38] sm:$0xf0] %vm222, %v277
        %284 = vrot.lane.b32.xlu0 %v205, 90
        %v285 = vpop.permute.xlu0 %284
        %286 = vrot.lane.b32.xlu0 %v207, 90
        %v287 = vpop.permute.xlu0 %286
        %vm288 = vcmask 736256
        %v289 = vsel %vm288, %v285, %v287
        %292 = vst [vmem:[#allocation2 + $0x40] sm:$0xf] %v289
        %293 = vst.msk [vmem:[#allocation2 + $0x48] sm:$0xf] %vm210, %v287
        %v294 = vld [vmem:[%s1] sm:$0xff]
        %v295 = vld [vmem:[#allocation2] sm:$0xff]
        %v296 = vld [vmem:[#allocation2 + $0x8] sm:$0xff]
        %v297 = vld [vmem:[#allocation2 + $0x10] sm:$0xff]
        %v298 = vld [vmem:[#allocation2 + $0x18] sm:$0xff]
        %v299 = vld [vmem:[#allocation2 + $0x20] sm:$0xff]
        %v300 = vld [vmem:[#allocation2 + $0x28] sm:$0xff]
        %v301 = vld [vmem:[#allocation2 + $0x30] sm:$0xff]
        %v302 = vld [vmem:[#allocation2 + $0x38] sm:$0xff]
        %v303 = vld [vmem:[#allocation2 + $0x40] sm:$0xf]
        %v304 = vld [vmem:[#allocation2 + $0x48] sm:$0xf]
        %v305 = vld [vmem:[%s2] sm:$0xff]
        %307 = vset.pattern.permute.xlu0 0
        %308 = vperm.xlu0 %307, %v305
        %v309 = vpop.permute.xlu0 %308
        %vm311 = vcmask 293888
        %v313 = vsel %vm311, %v294, 0
        %vm315 = vcmask 1043456
        %v317 = vsel %vm315, %v303, 0
        %v320 = vsel %vm315, %v304, 0
        %322 = vmatprep.subr.mxu0 %v296
        %323 = vmatpush1.msra.mxu0 %v295
        %324 = vmatprep.subr.mxu0 %v298
        %325 = vmatpush1.msra.mxu0 %v297
        %326 = vmatprep.subr.mxu0 %v300
        %327 = vmatpush1.msra.mxu0 %v299
        %328 = vmatprep.subr.mxu0 %v302
        %329 = vmatpush1.msra.mxu0 %v301
        %330 = vmatprep.subr.mxu0 %v320
        %331 = vmatpush1.msra.mxu0 %v317
        %332 = vmatprep.subr.mxu0 0.0
        %333 = vmatpush1.msra.mxu0 0.0
        %334 = vmatprep.subr.mxu0 0.0
        %335 = vmatpush1.msra.mxu0 0.0
        %336 = vmatprep.subr.mxu0 0.0
        %337 = vmatpush1.msra.mxu0 0.0
        %338 = vmatprep.subr.mxu0 0.0
        %339 = vmatpush1.msra.mxu0 0.0
        %340 = vmatprep.subr.mxu0 0.0
        %341 = vmatpush1.msra.mxu0 0.0
        %342 = vmatprep.subr.mxu0 0.0
        %343 = vmatpush1.msra.mxu0 0.0
        %344 = vmatprep.subr.mxu0 0.0
        %345 = vmatpush1.msra.mxu0 0.0
        %346 = vmatprep.subr.mxu0 0.0
        %347 = vmatpush1.msra.mxu0 0.0
        %348 = vmatprep.subr.mxu0 0.0
        %349 = vmatpush1.msra.mxu0 0.0
        %350 = vmatprep.subr.mxu0 0.0
        %351 = vmatpush1.msra.mxu0 0.0
        %352 = vmatprep.subr.mxu0 0.0
        %353 = vmatpush1.msra.mxu0 0.0
        %354 = vmatprep.subr.mxu0 0.0
        %355 = vmatpush1.msra.mxu0 0.0
        %356 = vmatprep.subr.mxu0 0.0
        %357 = vmatpush1.msra.mxu0 0.0
        %358 = vmatprep.subr.mxu0 0.0
        %359 = vmatpush1.msra.mxu0 0.0
        %360 = vmatprep.subr.mxu0 0.0
        %361 = vmatpush1.msra.mxu0 0.0
        %362 = vmatprep.subr.mxu0 0.0
        %363 = vmatpush1.msra.mxu0 0.0
        %364 = vmatprep.subr.mxu0 0.0
        %365 = vmatpush1.msra.mxu0 0.0
        %366 = vmatprep.subr.mxu0 0.0
        %367 = vmatpush1.msra.mxu0 0.0
        %368 = vmatprep.subr.mxu0 0.0
        %369 = vmatpush1.msra.mxu0 0.0
        %370 = vmatprep.subr.mxu0 0.0
        %371 = vmatpush1.msra.mxu0 0.0
        %372 = vmatprep.subr.mxu0 0.0
        %373 = vmatpush1.msra.mxu0 0.0
        %374 = vmatprep.subr.mxu0 0.0
        %375 = vmatpush1.msra.mxu0 0.0
        %376 = vmatprep.subr.mxu0 0.0
        %377 = vmatpush1.msra.mxu0 0.0
        %378 = vmatprep.subr.mxu0 0.0
        %379 = vmatpush1.msra.mxu0 0.0
        %380 = vmatprep.subr.mxu0 0.0
        %381 = vmatpush1.msra.mxu0 0.0
        %382 = vmatprep.subr.mxu0 0.0
        %383 = vmatpush1.msra.mxu0 0.0
        %384 = vmatprep.subr.mxu0 0.0
        %385 = vmatpush1.msra.mxu0 0.0
        %386 = vmatprep.mubr.f32.mxu0 0.0
        %387 = vmatmul.mubr.f32.gmra.mrb[0].mxu0 %v313
        %v388 = vpop.f32.mrb[0].mxu0
        %v389 = vadd.f32 %v309, %v388
        %v390 = vpop.f32.mrb[0].mxu0
        %v391 = vadd.f32 %v309, %v390
        %392 = vdwg.mxu0
        %v393 = vmul.f32 %v389, 0.01
        %v394 = vmul.f32 %v391, 0.01
        %v395 = vmax.f32 %v389, %v393
        %v396 = vmax.f32 %v391, %v394
        %397 = vst [vmem:[%s204] sm:$0xff] %v395
        %vm398 = vcmask 130048
        %399 = vst.msk [vmem:[%s204 + $0x8] sm:$0xff] %vm398, %v396
        %s400 = sand.u32 %s112, 1
        %s401 = scalar_lea.sflag [#allocation5], %s400
        %s402 = sand.u32 %s112, 1
        %s403 = smul.addr %s402, 16
        %s404 = scalar_lea.vmem [#allocation6], %s403
        // Predicated region
        $region37: #{tpu_custom_call.1} parent=31 // pred_check
          %p405 = pneg %p122
        $region38: #{tpu_custom_call.1} parent=31 // pred_check_branch
          %407 = sbr.rel (%p405) target = $region40
        $region39: #{tpu_custom_call.1} parent=31 // pred_region
          %s409 = ssub.s32 256, 256
          %410 = vsyncadd %s401, %s409
          %s411 = smul.addr %s25, 2
          %s412 = smul.addr %s24, 4
          %s413 = sadd.s32 %s411, %s412
          %s414 = smul.addr %s413, 128
          %s415 = scalar_lea.hbm %s3, %s414
          %s417 = sshll.u32 %s404, 4
          %s418 = int_to_ptr.vmem [resolvable:$true] %s417
          %420 = dma.vmem_to_hbm [thread:$0]  %s418, 256, %s415, %s401
        $region40: #{tpu_custom_call.1} parent=31 // pred_fallthru
          _
      $region32: #{tpu_custom_call.1} parent=5 // pred_fallthru
        _
      %p421 = scmp.le.s32.totalorder 2, %s15
      // Predicated region
      $region41: #{tpu_custom_call.1} parent=5 // pred_check
        %p422 = pneg %p421
      $region42: #{tpu_custom_call.1} parent=5 // pred_check_branch
        %424 = sbr.rel (%p422) target = $region44
      $region43: #{tpu_custom_call.1} parent=5 // pred_region
        %s425 = ssub.s32 %s15, 2
        // Predicated region
        $region45: #{tpu_custom_call.1} parent=43 // pred_check
          %p426 = pneg %p128
        $region46: #{tpu_custom_call.1} parent=43 // pred_check_branch
          %428 = sbr.rel (%p426) target = $region48
        $region47: #{tpu_custom_call.1} parent=43 // pred_region
          %s429 = sand.u32 %s113, 1
          %s430 = scalar_lea.sflag [#allocation5], %s429
          %s431 = sand.u32 %s113, 1
          %s432 = smul.addr %s431, 16
          %s433 = scalar_lea.vmem [#allocation6], %s432
          %434 = dma.done %s430, 256
        $region48: #{tpu_custom_call.1} parent=43 // pred_fallthru
          _
      $region44: #{tpu_custom_call.1} parent=5 // pred_fallthru
        _
    $region6: #{tpu_custom_call.1} parent=1 // loop_footer
      %s19 = sadd.s32 1, %s15
    $region7: #{tpu_custom_call.1} parent=1 // loop_footer_branch
      %14 = sbr.rel target = $region3
    $region8: #{tpu_custom_call.1} parent=1 // loop_exit
      _
    %435 = vsyncpa [#allocation4], 1
    %s436 = scalar_lea.sflag [#allocation4], 1
    %437 = vsyncpa %s436, 1
    %438 = vsyncpa [#allocation5], 1
    %s439 = scalar_lea.sflag [#allocation5], 1
    %440 = vsyncpa %s439, 1

</llo_original>
